<compile_context>
chip_gen: v7x
topology: tpu7x:2x2x1
jax: 0.10.0
libtpu: 0.0.40
codegen_flags: <defaults>
</compile_context>

<pallas_src>
import jax
import jax.numpy as jnp
from jax.experimental import pallas as pl
from jax.experimental.pallas import tpu as pltpu

_NUM_MAPS = 5                       # out, gt_pre4, gt_pre3, gt_pre2, gt_pre1
_STAT_ROWS = 3 * _NUM_MAPS + 1      # (pll, inter, psum) per map + shared target sum


def _stats_kernel(p0_ref, p1_ref, p2_ref, p3_ref, p4_ref, t_ref, out_ref):
    """Accumulate lane-partial loss statistics for all 5 prediction maps.

    Inputs: (B, TR, 128) blocks. Output block: (1, _STAT_ROWS, B, 128); it is revisited
    across the reduction (k) axis and used directly as the accumulator.
    """
    k = pl.program_id(1)

    @pl.when(k == 0)
    def _init():
        out_ref[...] = jnp.zeros_like(out_ref)

    t = t_ref[...].astype(jnp.float32)          # (B, TR, 128)
    one_minus_t = 1.0 - t

    row = 0
    for p_ref in (p0_ref, p1_ref, p2_ref, p3_ref, p4_ref):
        p = p_ref[...].astype(jnp.float32)
        # PyTorch nn.BCELoss clamps the log terms at -100 (valid for soft targets too;
        # also makes zero-padded elements contribute exactly 0).
        logp = jnp.maximum(jnp.log(p), -100.0)
        log1mp = jnp.maximum(jnp.log(1.0 - p), -100.0)
        # Positive log-likelihood; the BCE sign/mean is applied in the scalar glue.
        pll = t * logp + one_minus_t * log1mp
        out_ref[0, row + 0] += pll.sum(axis=1)        # (B, 128) lane-partial
        out_ref[0, row + 1] += (p * t).sum(axis=1)
        out_ref[0, row + 2] += p.sum(axis=1)
        row += 3
    out_ref[0, 3 * _NUM_MAPS] += t.sum(axis=1)        # target sum (shared by all maps)


def _round_up(x, m):
    return ((x + m - 1) // m) * m


def _choose_tiling(batch, num_rows, bytes_per_pos):
    """Pick (num_chunks, row_tile, k_steps, padded_rows) for the (B, rows, 128) layout."""
    # Double-buffered input working-set target (6 streams, native dtypes, 2 buffers):
    # ~12 MiB, leaving headroom for in-kernel f32 temporaries under the 48 MiB limit.
    budget_bytes = 12 * 1024 * 1024
    tr_max = budget_bytes // (2 * batch * 128 * bytes_per_pos)
    tr_max = max(8, (tr_max // 8) * 8)
    num_chunks = 2 if num_rows >= 16 else 1     # leading "parallel" axis (2nd TC on v7x)
    rows_per_chunk = -(-num_rows // num_chunks)
    tr = min(tr_max, _round_up(rows_per_chunk, 8))
    k_steps = -(-rows_per_chunk // tr)
    padded_rows = num_chunks * k_steps * tr
    return num_chunks, tr, k_steps, padded_rows


def _prep(x, batch, padded_rows):
    """Flatten NCHW -> (B, rows, 128) with a single zero-pad copy (or none) per array."""
    x2 = x.reshape(batch, -1)
    total = padded_rows * 128
    pad = total - x2.shape[1]
    if pad:
        x2 = jnp.pad(x2, ((0, 0), (0, pad)))
    return x2.reshape(batch, padded_rows, 128)


def _per_map_partials(p_list, t3, *, num_chunks, tr, k_steps):
    batch = t3.shape[0]
    in_block = pl.BlockSpec((batch, tr, 128), lambda c, k: (0, c * k_steps + k, 0))
    out_block = pl.BlockSpec((1, _STAT_ROWS, batch, 128), lambda c, k: (c, 0, 0, 0))
    return pl.pallas_call(
        _stats_kernel,
        out_shape=jax.ShapeDtypeStruct((num_chunks, _STAT_ROWS, batch, 128), jnp.float32),
        grid_spec=pltpu.PrefetchScalarGridSpec(
            num_scalar_prefetch=0,
            grid=(num_chunks, k_steps),
            in_specs=[in_block] * 6,
            out_specs=out_block,
        ),
        compiler_params=pltpu.CompilerParams(
            dimension_semantics=("parallel", "arbitrary"),
            vmem_limit_bytes=48 * 1024 * 1024,
        ),
    )(*p_list, t3)


def _bce_dice(pll_sum, inter, psum, tsum, n_elems, batch, wb, wd):
    smooth = 1.0
    bce = -pll_sum / (batch * n_elems)
    dice_score = (2.0 * inter + smooth) / (psum + tsum + smooth)
    dice_loss = 1.0 - dice_score.sum() / batch
    return wd * dice_loss + wb * bce


def gt_bce_dice_loss(gt_pre, out, target, wb=1.0, wd=1.0):
    """gt_pre: tuple (gt_pre4, gt_pre3, gt_pre2, gt_pre1), each same NCHW shape as out/target."""
    gt_pre4, gt_pre3, gt_pre2, gt_pre1 = gt_pre
    preds = (out, gt_pre4, gt_pre3, gt_pre2, gt_pre1)
    batch = out.shape[0]
    n_elems = out.size // batch

    num_rows = -(-n_elems // 128)
    bytes_per_pos = sum(jnp.dtype(p.dtype).itemsize for p in preds) \
        + jnp.dtype(target.dtype).itemsize
    num_chunks, tr, k_steps, padded_rows = _choose_tiling(batch, num_rows, bytes_per_pos)

    p_list = [_prep(p, batch, padded_rows) for p in preds]
    t3 = _prep(target, batch, padded_rows)

    partials = _per_map_partials(p_list, t3, num_chunks=num_chunks, tr=tr, k_steps=k_steps)
    stats = partials.sum(axis=(0, 3))   # (16, B): combine chunks + cross-lane reduce

    weights = (1.0, 0.2, 0.3, 0.4, 0.5)
    tsum = stats[3 * _NUM_MAPS]
    loss = jnp.float32(0.0)
    for m, w in enumerate(weights):
        pll_sum = stats[3 * m].sum()
        inter = stats[3 * m + 1]
        psum = stats[3 * m + 2]
        loss = loss + w * _bce_dice(pll_sum, inter, psum, tsum, n_elems, batch, wb, wd)
    return loss


def _reference_loss(gt_pre, out, target, wb=1.0, wd=1.0):
    def bcedice(pred, tgt):
        batch = pred.shape[0]
        p = pred.reshape(batch, -1).astype(jnp.float32)
        t = tgt.reshape(batch, -1).astype(jnp.float32)
        logp = jnp.maximum(jnp.log(p), -100.0)
        log1mp = jnp.maximum(jnp.log(1.0 - p), -100.0)
        bce = jnp.mean(-(t * logp + (1.0 - t) * log1mp))
        inter = (p * t).sum(1)
        dice = 1.0 - jnp.mean((2.0 * inter + 1.0) / (p.sum(1) + t.sum(1) + 1.0))
        return wd * dice + wb * bce

    gt_pre4, gt_pre3, gt_pre2, gt_pre1 = gt_pre
    return (bcedice(out, target)
            + 0.2 * bcedice(gt_pre4, target)
            + 0.3 * bcedice(gt_pre3, target)
            + 0.4 * bcedice(gt_pre2, target)
            + 0.5 * bcedice(gt_pre1, target))


def _run_case(key, shape):
    ks = jax.random.split(key, 6)
    out = jax.nn.sigmoid(jax.random.normal(ks[0], shape, jnp.float32))
    gt_pre4 = jax.nn.sigmoid(jax.random.normal(ks[1], shape, jnp.float32))
    gt_pre3 = jax.nn.sigmoid(jax.random.normal(ks[2], shape, jnp.float32))
    gt_pre2 = jax.nn.sigmoid(jax.random.normal(ks[3], shape, jnp.float32))
    gt_pre1 = jax.nn.sigmoid(jax.random.normal(ks[4], shape, jnp.float32))
    target = (jax.random.uniform(ks[5], shape) > 0.5).astype(jnp.float32)
    gt_pre = (gt_pre4, gt_pre3, gt_pre2, gt_pre1)

    loss = jax.jit(gt_bce_dice_loss)(gt_pre, out, target)
    loss = jax.block_until_ready(loss)
    ref = _reference_loss(gt_pre, out, target)
    assert jnp.allclose(loss, ref, rtol=1e-5, atol=1e-5), (shape, loss, ref)


if __name__ == "__main__":
    key = jax.random.PRNGKey(0)
    k1, k2 = jax.random.split(key)
    # Small case: N = 256 (2 lane rows, padded to one 8-row tile), single chunk.
    _run_case(k1, (2, 1, 16, 16))
    # Slightly larger case: exercises the 2-chunk "parallel" axis and row padding.
    _run_case(k2, (2, 1, 48, 48))
    print("KERNEL_OK")
</pallas_src>

<mosaic_0001>
module attributes {stable_mosaic.version = 11 : i64} {
  func.func @_stats_kernel(%arg0: i32, %arg1: i32, %arg2: memref<2x8x128xf32, #tpu.memory_space<vmem>>, %arg3: memref<2x8x128xf32, #tpu.memory_space<vmem>>, %arg4: memref<2x8x128xf32, #tpu.memory_space<vmem>>, %arg5: memref<2x8x128xf32, #tpu.memory_space<vmem>>, %arg6: memref<2x8x128xf32, #tpu.memory_space<vmem>>, %arg7: memref<2x8x128xf32, #tpu.memory_space<vmem>>, %arg8: memref<1x16x2x128xf32, #tpu.memory_space<vmem>>) attributes {dimension_semantics = [#tpu.dimension_semantics<parallel>, #tpu.dimension_semantics<arbitrary>], iteration_bounds = array<i64: 1, 1>, scalar_prefetch = 0 : i64, scratch_operands = 0 : i64, tpu.core_type = #tpu.core_type<tc>, window_params = [{transform_indices = @transform_0, window_bounds = array<i64: 2, 8, 128>}, {transform_indices = @transform_1, window_bounds = array<i64: 2, 8, 128>}, {transform_indices = @transform_2, window_bounds = array<i64: 2, 8, 128>}, {transform_indices = @transform_3, window_bounds = array<i64: 2, 8, 128>}, {transform_indices = @transform_4, window_bounds = array<i64: 2, 8, 128>}, {transform_indices = @transform_5, window_bounds = array<i64: 2, 8, 128>}, {transform_indices = @transform_6, window_bounds = array<i64: 1, 16, 2, 128>}]} {
    %c0_i32 = arith.constant 0 : i32
    %0 = arith.cmpi eq, %arg1, %c0_i32 : i32
    %1 = arith.extui %0 : i1 to i32
    %c0_i32_0 = arith.constant 0 : i32
    %2 = arith.cmpi ne, %1, %c0_i32_0 : i32
    scf.if %2 {
      %cst_162 = arith.constant 0.000000e+00 : f32
      %183 = vector.broadcast %cst_162 : f32 to vector<1x16x2x128xf32>
      %c0_163 = arith.constant 0 : index
      %c0_164 = arith.constant 0 : index
      %c0_165 = arith.constant 0 : index
      %c0_166 = arith.constant 0 : index
      %184 = vector.load %arg8[%c0_163, %c0_164, %c0_165, %c0_166] : memref<1x16x2x128xf32, #tpu.memory_space<vmem>>, vector<1x16x2x128xf32>
      tpu.vector_store %arg8[%c0_163, %c0_164, %c0_165, %c0_166], %183 {strides = array<i32>} : memref<1x16x2x128xf32, #tpu.memory_space<vmem>>, vector<1x16x2x128xf32>,
    } else {
    }
    %c0 = arith.constant 0 : index
    %c0_1 = arith.constant 0 : index
    %c0_2 = arith.constant 0 : index
    %3 = vector.load %arg7[%c0, %c0_1, %c0_2] : memref<2x8x128xf32, #tpu.memory_space<vmem>>, vector<2x8x128xf32>
    %cst = arith.constant 1.000000e+00 : f32
    %4 = vector.broadcast %cst : f32 to vector<2x8x128xf32>
    %5 = arith.subf %4, %3 : vector<2x8x128xf32>
    %c0_3 = arith.constant 0 : index
    %c0_4 = arith.constant 0 : index
    %c0_5 = arith.constant 0 : index
    %6 = vector.load %arg2[%c0_3, %c0_4, %c0_5] : memref<2x8x128xf32, #tpu.memory_space<vmem>>, vector<2x8x128xf32>
    %7 = math.log %6 : vector<2x8x128xf32>
    %cst_6 = arith.constant -1.000000e+02 : f32
    %8 = vector.broadcast %cst_6 : f32 to vector<2x8x128xf32>
    %9 = arith.maximumf %7, %8 : vector<2x8x128xf32>
    %cst_7 = arith.constant 1.000000e+00 : f32
    %10 = vector.broadcast %cst_7 : f32 to vector<2x8x128xf32>
    %11 = arith.subf %10, %6 : vector<2x8x128xf32>
    %12 = math.log %11 : vector<2x8x128xf32>
    %cst_8 = arith.constant -1.000000e+02 : f32
    %13 = vector.broadcast %cst_8 : f32 to vector<2x8x128xf32>
    %14 = arith.maximumf %12, %13 : vector<2x8x128xf32>
    %15 = arith.mulf %3, %9 : vector<2x8x128xf32>
    %16 = arith.mulf %5, %14 : vector<2x8x128xf32>
    %17 = arith.addf %15, %16 : vector<2x8x128xf32>
    %c0_9 = arith.constant 0 : index
    %c0_10 = arith.constant 0 : index
    %c0_11 = arith.constant 0 : index
    %c0_12 = arith.constant 0 : index
    %18 = vector.load %arg8[%c0_9, %c0_10, %c0_11, %c0_12] : memref<1x16x2x128xf32, #tpu.memory_space<vmem>>, vector<1x1x2x128xf32>
    %19 = vector.shape_cast %18 : vector<1x1x2x128xf32> to vector<2x128xf32>
    %cst_13 = arith.constant dense<0.000000e+00> : vector<2x128xf32>
    %20 = vector.multi_reduction <add>, %17, %cst_13 [1] : vector<2x8x128xf32> to vector<2x128xf32>
    %21 = arith.addf %19, %20 : vector<2x128xf32>
    %c0_14 = arith.constant 0 : index
    %c0_15 = arith.constant 0 : index
    %c0_16 = arith.constant 0 : index
    %c0_17 = arith.constant 0 : index
    %22 = vector.load %arg8[%c0_14, %c0_15, %c0_16, %c0_17] : memref<1x16x2x128xf32, #tpu.memory_space<vmem>>, vector<1x1x2x128xf32>
    %23 = vector.shape_cast %22 : vector<1x1x2x128xf32> to vector<2x128xf32>
    %24 = vector.shape_cast %21 : vector<2x128xf32> to vector<1x1x2x128xf32>
    tpu.vector_store %arg8[%c0_14, %c0_15, %c0_16, %c0_17], %24 {strides = array<i32>} : memref<1x16x2x128xf32, #tpu.memory_space<vmem>>, vector<1x1x2x128xf32>,
    %c0_18 = arith.constant 0 : index
    %c1 = arith.constant 1 : index
    %c0_19 = arith.constant 0 : index
    %c0_20 = arith.constant 0 : index
    %25 = vector.load %arg8[%c0_18, %c1, %c0_19, %c0_20] : memref<1x16x2x128xf32, #tpu.memory_space<vmem>>, vector<1x1x2x128xf32>
    %26 = vector.shape_cast %25 : vector<1x1x2x128xf32> to vector<2x128xf32>
    %27 = arith.mulf %6, %3 : vector<2x8x128xf32>
    %cst_21 = arith.constant dense<0.000000e+00> : vector<2x128xf32>
    %28 = vector.multi_reduction <add>, %27, %cst_21 [1] : vector<2x8x128xf32> to vector<2x128xf32>
    %29 = arith.addf %26, %28 : vector<2x128xf32>
    %c0_22 = arith.constant 0 : index
    %c1_23 = arith.constant 1 : index
    %c0_24 = arith.constant 0 : index
    %c0_25 = arith.constant 0 : index
    %30 = vector.load %arg8[%c0_22, %c1_23, %c0_24, %c0_25] : memref<1x16x2x128xf32, #tpu.memory_space<vmem>>, vector<1x1x2x128xf32>
    %31 = vector.shape_cast %30 : vector<1x1x2x128xf32> to vector<2x128xf32>
    %32 = vector.shape_cast %29 : vector<2x128xf32> to vector<1x1x2x128xf32>
    tpu.vector_store %arg8[%c0_22, %c1_23, %c0_24, %c0_25], %32 {strides = array<i32>} : memref<1x16x2x128xf32, #tpu.memory_space<vmem>>, vector<1x1x2x128xf32>,
    %c0_26 = arith.constant 0 : index
    %c2 = arith.constant 2 : index
    %c0_27 = arith.constant 0 : index
    %c0_28 = arith.constant 0 : index
    %33 = vector.load %arg8[%c0_26, %c2, %c0_27, %c0_28] : memref<1x16x2x128xf32, #tpu.memory_space<vmem>>, vector<1x1x2x128xf32>
    %34 = vector.shape_cast %33 : vector<1x1x2x128xf32> to vector<2x128xf32>
    %cst_29 = arith.constant dense<0.000000e+00> : vector<2x128xf32>
    %35 = vector.multi_reduction <add>, %6, %cst_29 [1] : vector<2x8x128xf32> to vector<2x128xf32>
    %36 = arith.addf %34, %35 : vector<2x128xf32>
    %c0_30 = arith.constant 0 : index
    %c2_31 = arith.constant 2 : index
    %c0_32 = arith.constant 0 : index
    %c0_33 = arith.constant 0 : index
    %37 = vector.load %arg8[%c0_30, %c2_31, %c0_32, %c0_33] : memref<1x16x2x128xf32, #tpu.memory_space<vmem>>, vector<1x1x2x128xf32>
    %38 = vector.shape_cast %37 : vector<1x1x2x128xf32> to vector<2x128xf32>
    %39 = vector.shape_cast %36 : vector<2x128xf32> to vector<1x1x2x128xf32>
    tpu.vector_store %arg8[%c0_30, %c2_31, %c0_32, %c0_33], %39 {strides = array<i32>} : memref<1x16x2x128xf32, #tpu.memory_space<vmem>>, vector<1x1x2x128xf32>,
    %c0_34 = arith.constant 0 : index
    %c0_35 = arith.constant 0 : index
    %c0_36 = arith.constant 0 : index
    %40 = vector.load %arg3[%c0_34, %c0_35, %c0_36] : memref<2x8x128xf32, #tpu.memory_space<vmem>>, vector<2x8x128xf32>
    %41 = math.log %40 : vector<2x8x128xf32>
    %cst_37 = arith.constant -1.000000e+02 : f32
    %42 = vector.broadcast %cst_37 : f32 to vector<2x8x128xf32>
    %43 = arith.maximumf %41, %42 : vector<2x8x128xf32>
    %cst_38 = arith.constant 1.000000e+00 : f32
    %44 = vector.broadcast %cst_38 : f32 to vector<2x8x128xf32>
    %45 = arith.subf %44, %40 : vector<2x8x128xf32>
    %46 = math.log %45 : vector<2x8x128xf32>
    %cst_39 = arith.constant -1.000000e+02 : f32
    %47 = vector.broadcast %cst_39 : f32 to vector<2x8x128xf32>
    %48 = arith.maximumf %46, %47 : vector<2x8x128xf32>
    %49 = arith.mulf %3, %43 : vector<2x8x128xf32>
    %50 = arith.mulf %5, %48 : vector<2x8x128xf32>
    %51 = arith.addf %49, %50 : vector<2x8x128xf32>
    %c0_40 = arith.constant 0 : index
    %c3 = arith.constant 3 : index
    %c0_41 = arith.constant 0 : index
    %c0_42 = arith.constant 0 : index
    %52 = vector.load %arg8[%c0_40, %c3, %c0_41, %c0_42] : memref<1x16x2x128xf32, #tpu.memory_space<vmem>>, vector<1x1x2x128xf32>
    %53 = vector.shape_cast %52 : vector<1x1x2x128xf32> to vector<2x128xf32>
    %cst_43 = arith.constant dense<0.000000e+00> : vector<2x128xf32>
    %54 = vector.multi_reduction <add>, %51, %cst_43 [1] : vector<2x8x128xf32> to vector<2x128xf32>
    %55 = arith.addf %53, %54 : vector<2x128xf32>
    %c0_44 = arith.constant 0 : index
    %c3_45 = arith.constant 3 : index
    %c0_46 = arith.constant 0 : index
    %c0_47 = arith.constant 0 : index
    %56 = vector.load %arg8[%c0_44, %c3_45, %c0_46, %c0_47] : memref<1x16x2x128xf32, #tpu.memory_space<vmem>>, vector<1x1x2x128xf32>
    %57 = vector.shape_cast %56 : vector<1x1x2x128xf32> to vector<2x128xf32>
    %58 = vector.shape_cast %55 : vector<2x128xf32> to vector<1x1x2x128xf32>
    tpu.vector_store %arg8[%c0_44, %c3_45, %c0_46, %c0_47], %58 {strides = array<i32>} : memref<1x16x2x128xf32, #tpu.memory_space<vmem>>, vector<1x1x2x128xf32>,
    %c0_48 = arith.constant 0 : index
    %c4 = arith.constant 4 : index
    %c0_49 = arith.constant 0 : index
    %c0_50 = arith.constant 0 : index
    %59 = vector.load %arg8[%c0_48, %c4, %c0_49, %c0_50] : memref<1x16x2x128xf32, #tpu.memory_space<vmem>>, vector<1x1x2x128xf32>
    %60 = vector.shape_cast %59 : vector<1x1x2x128xf32> to vector<2x128xf32>
    %61 = arith.mulf %40, %3 : vector<2x8x128xf32>
    %cst_51 = arith.constant dense<0.000000e+00> : vector<2x128xf32>
    %62 = vector.multi_reduction <add>, %61, %cst_51 [1] : vector<2x8x128xf32> to vector<2x128xf32>
    %63 = arith.addf %60, %62 : vector<2x128xf32>
    %c0_52 = arith.constant 0 : index
    %c4_53 = arith.constant 4 : index
    %c0_54 = arith.constant 0 : index
    %c0_55 = arith.constant 0 : index
    %64 = vector.load %arg8[%c0_52, %c4_53, %c0_54, %c0_55] : memref<1x16x2x128xf32, #tpu.memory_space<vmem>>, vector<1x1x2x128xf32>
    %65 = vector.shape_cast %64 : vector<1x1x2x128xf32> to vector<2x128xf32>
    %66 = vector.shape_cast %63 : vector<2x128xf32> to vector<1x1x2x128xf32>
    tpu.vector_store %arg8[%c0_52, %c4_53, %c0_54, %c0_55], %66 {strides = array<i32>} : memref<1x16x2x128xf32, #tpu.memory_space<vmem>>, vector<1x1x2x128xf32>,
    %c0_56 = arith.constant 0 : index
    %c5 = arith.constant 5 : index
    %c0_57 = arith.constant 0 : index
    %c0_58 = arith.constant 0 : index
    %67 = vector.load %arg8[%c0_56, %c5, %c0_57, %c0_58] : memref<1x16x2x128xf32, #tpu.memory_space<vmem>>, vector<1x1x2x128xf32>
    %68 = vector.shape_cast %67 : vector<1x1x2x128xf32> to vector<2x128xf32>
    %cst_59 = arith.constant dense<0.000000e+00> : vector<2x128xf32>
    %69 = vector.multi_reduction <add>, %40, %cst_59 [1] : vector<2x8x128xf32> to vector<2x128xf32>
    %70 = arith.addf %68, %69 : vector<2x128xf32>
    %c0_60 = arith.constant 0 : index
    %c5_61 = arith.constant 5 : index
    %c0_62 = arith.constant 0 : index
    %c0_63 = arith.constant 0 : index
    %71 = vector.load %arg8[%c0_60, %c5_61, %c0_62, %c0_63] : memref<1x16x2x128xf32, #tpu.memory_space<vmem>>, vector<1x1x2x128xf32>
    %72 = vector.shape_cast %71 : vector<1x1x2x128xf32> to vector<2x128xf32>
    %73 = vector.shape_cast %70 : vector<2x128xf32> to vector<1x1x2x128xf32>
    tpu.vector_store %arg8[%c0_60, %c5_61, %c0_62, %c0_63], %73 {strides = array<i32>} : memref<1x16x2x128xf32, #tpu.memory_space<vmem>>, vector<1x1x2x128xf32>,
    %c0_64 = arith.constant 0 : index
    %c0_65 = arith.constant 0 : index
    %c0_66 = arith.constant 0 : index
    %74 = vector.load %arg4[%c0_64, %c0_65, %c0_66] : memref<2x8x128xf32, #tpu.memory_space<vmem>>, vector<2x8x128xf32>
    %75 = math.log %74 : vector<2x8x128xf32>
    %cst_67 = arith.constant -1.000000e+02 : f32
    %76 = vector.broadcast %cst_67 : f32 to vector<2x8x128xf32>
    %77 = arith.maximumf %75, %76 : vector<2x8x128xf32>
    %cst_68 = arith.constant 1.000000e+00 : f32
    %78 = vector.broadcast %cst_68 : f32 to vector<2x8x128xf32>
    %79 = arith.subf %78, %74 : vector<2x8x128xf32>
    %80 = math.log %79 : vector<2x8x128xf32>
    %cst_69 = arith.constant -1.000000e+02 : f32
    %81 = vector.broadcast %cst_69 : f32 to vector<2x8x128xf32>
    %82 = arith.maximumf %80, %81 : vector<2x8x128xf32>
    %83 = arith.mulf %3, %77 : vector<2x8x128xf32>
    %84 = arith.mulf %5, %82 : vector<2x8x128xf32>
    %85 = arith.addf %83, %84 : vector<2x8x128xf32>
    %c0_70 = arith.constant 0 : index
    %c6 = arith.constant 6 : index
    %c0_71 = arith.constant 0 : index
    %c0_72 = arith.constant 0 : index
    %86 = vector.load %arg8[%c0_70, %c6, %c0_71, %c0_72] : memref<1x16x2x128xf32, #tpu.memory_space<vmem>>, vector<1x1x2x128xf32>
    %87 = vector.shape_cast %86 : vector<1x1x2x128xf32> to vector<2x128xf32>
    %cst_73 = arith.constant dense<0.000000e+00> : vector<2x128xf32>
    %88 = vector.multi_reduction <add>, %85, %cst_73 [1] : vector<2x8x128xf32> to vector<2x128xf32>
    %89 = arith.addf %87, %88 : vector<2x128xf32>
    %c0_74 = arith.constant 0 : index
    %c6_75 = arith.constant 6 : index
    %c0_76 = arith.constant 0 : index
    %c0_77 = arith.constant 0 : index
    %90 = vector.load %arg8[%c0_74, %c6_75, %c0_76, %c0_77] : memref<1x16x2x128xf32, #tpu.memory_space<vmem>>, vector<1x1x2x128xf32>
    %91 = vector.shape_cast %90 : vector<1x1x2x128xf32> to vector<2x128xf32>
    %92 = vector.shape_cast %89 : vector<2x128xf32> to vector<1x1x2x128xf32>
    tpu.vector_store %arg8[%c0_74, %c6_75, %c0_76, %c0_77], %92 {strides = array<i32>} : memref<1x16x2x128xf32, #tpu.memory_space<vmem>>, vector<1x1x2x128xf32>,
    %c0_78 = arith.constant 0 : index
    %c7 = arith.constant 7 : index
    %c0_79 = arith.constant 0 : index
    %c0_80 = arith.constant 0 : index
    %93 = vector.load %arg8[%c0_78, %c7, %c0_79, %c0_80] : memref<1x16x2x128xf32, #tpu.memory_space<vmem>>, vector<1x1x2x128xf32>
    %94 = vector.shape_cast %93 : vector<1x1x2x128xf32> to vector<2x128xf32>
    %95 = arith.mulf %74, %3 : vector<2x8x128xf32>
    %cst_81 = arith.constant dense<0.000000e+00> : vector<2x128xf32>
    %96 = vector.multi_reduction <add>, %95, %cst_81 [1] : vector<2x8x128xf32> to vector<2x128xf32>
    %97 = arith.addf %94, %96 : vector<2x128xf32>
    %c0_82 = arith.constant 0 : index
    %c7_83 = arith.constant 7 : index
    %c0_84 = arith.constant 0 : index
    %c0_85 = arith.constant 0 : index
    %98 = vector.load %arg8[%c0_82, %c7_83, %c0_84, %c0_85] : memref<1x16x2x128xf32, #tpu.memory_space<vmem>>, vector<1x1x2x128xf32>
    %99 = vector.shape_cast %98 : vector<1x1x2x128xf32> to vector<2x128xf32>
    %100 = vector.shape_cast %97 : vector<2x128xf32> to vector<1x1x2x128xf32>
    tpu.vector_store %arg8[%c0_82, %c7_83, %c0_84, %c0_85], %100 {strides = array<i32>} : memref<1x16x2x128xf32, #tpu.memory_space<vmem>>, vector<1x1x2x128xf32>,
    %c0_86 = arith.constant 0 : index
    %c8 = arith.constant 8 : index
    %c0_87 = arith.constant 0 : index
    %c0_88 = arith.constant 0 : index
    %101 = vector.load %arg8[%c0_86, %c8, %c0_87, %c0_88] : memref<1x16x2x128xf32, #tpu.memory_space<vmem>>, vector<1x1x2x128xf32>
    %102 = vector.shape_cast %101 : vector<1x1x2x128xf32> to vector<2x128xf32>
    %cst_89 = arith.constant dense<0.000000e+00> : vector<2x128xf32>
    %103 = vector.multi_reduction <add>, %74, %cst_89 [1] : vector<2x8x128xf32> to vector<2x128xf32>
    %104 = arith.addf %102, %103 : vector<2x128xf32>
    %c0_90 = arith.constant 0 : index
    %c8_91 = arith.constant 8 : index
    %c0_92 = arith.constant 0 : index
    %c0_93 = arith.constant 0 : index
    %105 = vector.load %arg8[%c0_90, %c8_91, %c0_92, %c0_93] : memref<1x16x2x128xf32, #tpu.memory_space<vmem>>, vector<1x1x2x128xf32>
    %106 = vector.shape_cast %105 : vector<1x1x2x128xf32> to vector<2x128xf32>
    %107 = vector.shape_cast %104 : vector<2x128xf32> to vector<1x1x2x128xf32>
    tpu.vector_store %arg8[%c0_90, %c8_91, %c0_92, %c0_93], %107 {strides = array<i32>} : memref<1x16x2x128xf32, #tpu.memory_space<vmem>>, vector<1x1x2x128xf32>,
    %c0_94 = arith.constant 0 : index
    %c0_95 = arith.constant 0 : index
    %c0_96 = arith.constant 0 : index
    %108 = vector.load %arg5[%c0_94, %c0_95, %c0_96] : memref<2x8x128xf32, #tpu.memory_space<vmem>>, vector<2x8x128xf32>
    %109 = math.log %108 : vector<2x8x128xf32>
    %cst_97 = arith.constant -1.000000e+02 : f32
    %110 = vector.broadcast %cst_97 : f32 to vector<2x8x128xf32>
    %111 = arith.maximumf %109, %110 : vector<2x8x128xf32>
    %cst_98 = arith.constant 1.000000e+00 : f32
    %112 = vector.broadcast %cst_98 : f32 to vector<2x8x128xf32>
    %113 = arith.subf %112, %108 : vector<2x8x128xf32>
    %114 = math.log %113 : vector<2x8x128xf32>
    %cst_99 = arith.constant -1.000000e+02 : f32
    %115 = vector.broadcast %cst_99 : f32 to vector<2x8x128xf32>
    %116 = arith.maximumf %114, %115 : vector<2x8x128xf32>
    %117 = arith.mulf %3, %111 : vector<2x8x128xf32>
    %118 = arith.mulf %5, %116 : vector<2x8x128xf32>
    %119 = arith.addf %117, %118 : vector<2x8x128xf32>
    %c0_100 = arith.constant 0 : index
    %c9 = arith.constant 9 : index
    %c0_101 = arith.constant 0 : index
    %c0_102 = arith.constant 0 : index
    %120 = vector.load %arg8[%c0_100, %c9, %c0_101, %c0_102] : memref<1x16x2x128xf32, #tpu.memory_space<vmem>>, vector<1x1x2x128xf32>
    %121 = vector.shape_cast %120 : vector<1x1x2x128xf32> to vector<2x128xf32>
    %cst_103 = arith.constant dense<0.000000e+00> : vector<2x128xf32>
    %122 = vector.multi_reduction <add>, %119, %cst_103 [1] : vector<2x8x128xf32> to vector<2x128xf32>
    %123 = arith.addf %121, %122 : vector<2x128xf32>
    %c0_104 = arith.constant 0 : index
    %c9_105 = arith.constant 9 : index
    %c0_106 = arith.constant 0 : index
    %c0_107 = arith.constant 0 : index
    %124 = vector.load %arg8[%c0_104, %c9_105, %c0_106, %c0_107] : memref<1x16x2x128xf32, #tpu.memory_space<vmem>>, vector<1x1x2x128xf32>
    %125 = vector.shape_cast %124 : vector<1x1x2x128xf32> to vector<2x128xf32>
    %126 = vector.shape_cast %123 : vector<2x128xf32> to vector<1x1x2x128xf32>
    tpu.vector_store %arg8[%c0_104, %c9_105, %c0_106, %c0_107], %126 {strides = array<i32>} : memref<1x16x2x128xf32, #tpu.memory_space<vmem>>, vector<1x1x2x128xf32>,
    %c0_108 = arith.constant 0 : index
    %c10 = arith.constant 10 : index
    %c0_109 = arith.constant 0 : index
    %c0_110 = arith.constant 0 : index
    %127 = vector.load %arg8[%c0_108, %c10, %c0_109, %c0_110] : memref<1x16x2x128xf32, #tpu.memory_space<vmem>>, vector<1x1x2x128xf32>
    %128 = vector.shape_cast %127 : vector<1x1x2x128xf32> to vector<2x128xf32>
    %129 = arith.mulf %108, %3 : vector<2x8x128xf32>
    %cst_111 = arith.constant dense<0.000000e+00> : vector<2x128xf32>
    %130 = vector.multi_reduction <add>, %129, %cst_111 [1] : vector<2x8x128xf32> to vector<2x128xf32>
    %131 = arith.addf %128, %130 : vector<2x128xf32>
    %c0_112 = arith.constant 0 : index
    %c10_113 = arith.constant 10 : index
    %c0_114 = arith.constant 0 : index
    %c0_115 = arith.constant 0 : index
    %132 = vector.load %arg8[%c0_112, %c10_113, %c0_114, %c0_115] : memref<1x16x2x128xf32, #tpu.memory_space<vmem>>, vector<1x1x2x128xf32>
    %133 = vector.shape_cast %132 : vector<1x1x2x128xf32> to vector<2x128xf32>
    %134 = vector.shape_cast %131 : vector<2x128xf32> to vector<1x1x2x128xf32>
    tpu.vector_store %arg8[%c0_112, %c10_113, %c0_114, %c0_115], %134 {strides = array<i32>} : memref<1x16x2x128xf32, #tpu.memory_space<vmem>>, vector<1x1x2x128xf32>,
    %c0_116 = arith.constant 0 : index
    %c11 = arith.constant 11 : index
    %c0_117 = arith.constant 0 : index
    %c0_118 = arith.constant 0 : index
    %135 = vector.load %arg8[%c0_116, %c11, %c0_117, %c0_118] : memref<1x16x2x128xf32, #tpu.memory_space<vmem>>, vector<1x1x2x128xf32>
    %136 = vector.shape_cast %135 : vector<1x1x2x128xf32> to vector<2x128xf32>
    %cst_119 = arith.constant dense<0.000000e+00> : vector<2x128xf32>
    %137 = vector.multi_reduction <add>, %108, %cst_119 [1] : vector<2x8x128xf32> to vector<2x128xf32>
    %138 = arith.addf %136, %137 : vector<2x128xf32>
    %c0_120 = arith.constant 0 : index
    %c11_121 = arith.constant 11 : index
    %c0_122 = arith.constant 0 : index
    %c0_123 = arith.constant 0 : index
    %139 = vector.load %arg8[%c0_120, %c11_121, %c0_122, %c0_123] : memref<1x16x2x128xf32, #tpu.memory_space<vmem>>, vector<1x1x2x128xf32>
    %140 = vector.shape_cast %139 : vector<1x1x2x128xf32> to vector<2x128xf32>
    %141 = vector.shape_cast %138 : vector<2x128xf32> to vector<1x1x2x128xf32>
    tpu.vector_store %arg8[%c0_120, %c11_121, %c0_122, %c0_123], %141 {strides = array<i32>} : memref<1x16x2x128xf32, #tpu.memory_space<vmem>>, vector<1x1x2x128xf32>,
    %c0_124 = arith.constant 0 : index
    %c0_125 = arith.constant 0 : index
    %c0_126 = arith.constant 0 : index
    %142 = vector.load %arg6[%c0_124, %c0_125, %c0_126] : memref<2x8x128xf32, #tpu.memory_space<vmem>>, vector<2x8x128xf32>
    %143 = math.log %142 : vector<2x8x128xf32>
    %cst_127 = arith.constant -1.000000e+02 : f32
    %144 = vector.broadcast %cst_127 : f32 to vector<2x8x128xf32>
    %145 = arith.maximumf %143, %144 : vector<2x8x128xf32>
    %cst_128 = arith.constant 1.000000e+00 : f32
    %146 = vector.broadcast %cst_128 : f32 to vector<2x8x128xf32>
    %147 = arith.subf %146, %142 : vector<2x8x128xf32>
    %148 = math.log %147 : vector<2x8x128xf32>
    %cst_129 = arith.constant -1.000000e+02 : f32
    %149 = vector.broadcast %cst_129 : f32 to vector<2x8x128xf32>
    %150 = arith.maximumf %148, %149 : vector<2x8x128xf32>
    %151 = arith.mulf %3, %145 : vector<2x8x128xf32>
    %152 = arith.mulf %5, %150 : vector<2x8x128xf32>
    %153 = arith.addf %151, %152 : vector<2x8x128xf32>
    %c0_130 = arith.constant 0 : index
    %c12 = arith.constant 12 : index
    %c0_131 = arith.constant 0 : index
    %c0_132 = arith.constant 0 : index
    %154 = vector.load %arg8[%c0_130, %c12, %c0_131, %c0_132] : memref<1x16x2x128xf32, #tpu.memory_space<vmem>>, vector<1x1x2x128xf32>
    %155 = vector.shape_cast %154 : vector<1x1x2x128xf32> to vector<2x128xf32>
    %cst_133 = arith.constant dense<0.000000e+00> : vector<2x128xf32>
    %156 = vector.multi_reduction <add>, %153, %cst_133 [1] : vector<2x8x128xf32> to vector<2x128xf32>
    %157 = arith.addf %155, %156 : vector<2x128xf32>
    %c0_134 = arith.constant 0 : index
    %c12_135 = arith.constant 12 : index
    %c0_136 = arith.constant 0 : index
    %c0_137 = arith.constant 0 : index
    %158 = vector.load %arg8[%c0_134, %c12_135, %c0_136, %c0_137] : memref<1x16x2x128xf32, #tpu.memory_space<vmem>>, vector<1x1x2x128xf32>
    %159 = vector.shape_cast %158 : vector<1x1x2x128xf32> to vector<2x128xf32>
    %160 = vector.shape_cast %157 : vector<2x128xf32> to vector<1x1x2x128xf32>
    tpu.vector_store %arg8[%c0_134, %c12_135, %c0_136, %c0_137], %160 {strides = array<i32>} : memref<1x16x2x128xf32, #tpu.memory_space<vmem>>, vector<1x1x2x128xf32>,
    %c0_138 = arith.constant 0 : index
    %c13 = arith.constant 13 : index
    %c0_139 = arith.constant 0 : index
    %c0_140 = arith.constant 0 : index
    %161 = vector.load %arg8[%c0_138, %c13, %c0_139, %c0_140] : memref<1x16x2x128xf32, #tpu.memory_space<vmem>>, vector<1x1x2x128xf32>
    %162 = vector.shape_cast %161 : vector<1x1x2x128xf32> to vector<2x128xf32>
    %163 = arith.mulf %142, %3 : vector<2x8x128xf32>
    %cst_141 = arith.constant dense<0.000000e+00> : vector<2x128xf32>
    %164 = vector.multi_reduction <add>, %163, %cst_141 [1] : vector<2x8x128xf32> to vector<2x128xf32>
    %165 = arith.addf %162, %164 : vector<2x128xf32>
    %c0_142 = arith.constant 0 : index
    %c13_143 = arith.constant 13 : index
    %c0_144 = arith.constant 0 : index
    %c0_145 = arith.constant 0 : index
    %166 = vector.load %arg8[%c0_142, %c13_143, %c0_144, %c0_145] : memref<1x16x2x128xf32, #tpu.memory_space<vmem>>, vector<1x1x2x128xf32>
    %167 = vector.shape_cast %166 : vector<1x1x2x128xf32> to vector<2x128xf32>
    %168 = vector.shape_cast %165 : vector<2x128xf32> to vector<1x1x2x128xf32>
    tpu.vector_store %arg8[%c0_142, %c13_143, %c0_144, %c0_145], %168 {strides = array<i32>} : memref<1x16x2x128xf32, #tpu.memory_space<vmem>>, vector<1x1x2x128xf32>,
    %c0_146 = arith.constant 0 : index
    %c14 = arith.constant 14 : index
    %c0_147 = arith.constant 0 : index
    %c0_148 = arith.constant 0 : index
    %169 = vector.load %arg8[%c0_146, %c14, %c0_147, %c0_148] : memref<1x16x2x128xf32, #tpu.memory_space<vmem>>, vector<1x1x2x128xf32>
    %170 = vector.shape_cast %169 : vector<1x1x2x128xf32> to vector<2x128xf32>
    %cst_149 = arith.constant dense<0.000000e+00> : vector<2x128xf32>
    %171 = vector.multi_reduction <add>, %142, %cst_149 [1] : vector<2x8x128xf32> to vector<2x128xf32>
    %172 = arith.addf %170, %171 : vector<2x128xf32>
    %c0_150 = arith.constant 0 : index
    %c14_151 = arith.constant 14 : index
    %c0_152 = arith.constant 0 : index
    %c0_153 = arith.constant 0 : index
    %173 = vector.load %arg8[%c0_150, %c14_151, %c0_152, %c0_153] : memref<1x16x2x128xf32, #tpu.memory_space<vmem>>, vector<1x1x2x128xf32>
    %174 = vector.shape_cast %173 : vector<1x1x2x128xf32> to vector<2x128xf32>
    %175 = vector.shape_cast %172 : vector<2x128xf32> to vector<1x1x2x128xf32>
    tpu.vector_store %arg8[%c0_150, %c14_151, %c0_152, %c0_153], %175 {strides = array<i32>} : memref<1x16x2x128xf32, #tpu.memory_space<vmem>>, vector<1x1x2x128xf32>,
    %c0_154 = arith.constant 0 : index
    %c15 = arith.constant 15 : index
    %c0_155 = arith.constant 0 : index
    %c0_156 = arith.constant 0 : index
    %176 = vector.load %arg8[%c0_154, %c15, %c0_155, %c0_156] : memref<1x16x2x128xf32, #tpu.memory_space<vmem>>, vector<1x1x2x128xf32>
    %177 = vector.shape_cast %176 : vector<1x1x2x128xf32> to vector<2x128xf32>
    %cst_157 = arith.constant dense<0.000000e+00> : vector<2x128xf32>
    %178 = vector.multi_reduction <add>, %3, %cst_157 [1] : vector<2x8x128xf32> to vector<2x128xf32>
    %179 = arith.addf %177, %178 : vector<2x128xf32>
    %c0_158 = arith.constant 0 : index
    %c15_159 = arith.constant 15 : index
    %c0_160 = arith.constant 0 : index
    %c0_161 = arith.constant 0 : index
    %180 = vector.load %arg8[%c0_158, %c15_159, %c0_160, %c0_161] : memref<1x16x2x128xf32, #tpu.memory_space<vmem>>, vector<1x1x2x128xf32>
    %181 = vector.shape_cast %180 : vector<1x1x2x128xf32> to vector<2x128xf32>
    %182 = vector.shape_cast %179 : vector<2x128xf32> to vector<1x1x2x128xf32>
    tpu.vector_store %arg8[%c0_158, %c15_159, %c0_160, %c0_161], %182 {strides = array<i32>} : memref<1x16x2x128xf32, #tpu.memory_space<vmem>>, vector<1x1x2x128xf32>,
    return
  }
  func.func @transform_0(%arg0: i32, %arg1: i32) -> (i32, i32, i32) {
    %c1_i32 = arith.constant 1 : i32
    %0 = arith.muli %arg0, %c1_i32 : i32
    %1 = arith.addi %0, %arg1 : i32
    %c0_i32 = arith.constant 0 : i32
    %c0_i32_0 = arith.constant 0 : i32
    %c0_i32_1 = arith.constant 0 : i32
    return %c0_i32, %1, %c0_i32_0 : i32, i32, i32
  }
  func.func @transform_1(%arg0: i32, %arg1: i32) -> (i32, i32, i32) {
    %c1_i32 = arith.constant 1 : i32
    %0 = arith.muli %arg0, %c1_i32 : i32
    %1 = arith.addi %0, %arg1 : i32
    %c0_i32 = arith.constant 0 : i32
    %c0_i32_0 = arith.constant 0 : i32
    %c0_i32_1 = arith.constant 0 : i32
    return %c0_i32, %1, %c0_i32_0 : i32, i32, i32
  }
  func.func @transform_2(%arg0: i32, %arg1: i32) -> (i32, i32, i32) {
    %c1_i32 = arith.constant 1 : i32
    %0 = arith.muli %arg0, %c1_i32 : i32
    %1 = arith.addi %0, %arg1 : i32
    %c0_i32 = arith.constant 0 : i32
    %c0_i32_0 = arith.constant 0 : i32
    %c0_i32_1 = arith.constant 0 : i32
    return %c0_i32, %1, %c0_i32_0 : i32, i32, i32
  }
  func.func @transform_3(%arg0: i32, %arg1: i32) -> (i32, i32, i32) {
    %c1_i32 = arith.constant 1 : i32
    %0 = arith.muli %arg0, %c1_i32 : i32
    %1 = arith.addi %0, %arg1 : i32
    %c0_i32 = arith.constant 0 : i32
    %c0_i32_0 = arith.constant 0 : i32
    %c0_i32_1 = arith.constant 0 : i32
    return %c0_i32, %1, %c0_i32_0 : i32, i32, i32
  }
  func.func @transform_4(%arg0: i32, %arg1: i32) -> (i32, i32, i32) {
    %c1_i32 = arith.constant 1 : i32
    %0 = arith.muli %arg0, %c1_i32 : i32
    %1 = arith.addi %0, %arg1 : i32
    %c0_i32 = arith.constant 0 : i32
    %c0_i32_0 = arith.constant 0 : i32
    %c0_i32_1 = arith.constant 0 : i32
    return %c0_i32, %1, %c0_i32_0 : i32, i32, i32
  }
  func.func @transform_5(%arg0: i32, %arg1: i32) -> (i32, i32, i32) {
    %c1_i32 = arith.constant 1 : i32
    %0 = arith.muli %arg0, %c1_i32 : i32
    %1 = arith.addi %0, %arg1 : i32
    %c0_i32 = arith.constant 0 : i32
    %c0_i32_0 = arith.constant 0 : i32
    %c0_i32_1 = arith.constant 0 : i32
    return %c0_i32, %1, %c0_i32_0 : i32, i32, i32
  }
  func.func @transform_6(%arg0: i32, %arg1: i32) -> (i32, i32, i32, i32) {
    %c0_i32 = arith.constant 0 : i32
    %c0_i32_0 = arith.constant 0 : i32
    %c0_i32_1 = arith.constant 0 : i32
    %c0_i32_2 = arith.constant 0 : i32
    return %arg0, %c0_i32, %c0_i32_0, %c0_i32_1 : i32, i32, i32, i32
  }
}

</mosaic_0001>

<llo_original>
// kernel: gt_bce_dice_loss.1
$region0: #{gt_bce_dice_loss.1}
  #allocation0 [shape = 'u32[]', space=smem, size = 0x4, offset = 0x4, fixed_abs, tag = 'smem constant byte address 0x4 - core index']
  #allocation1 [shape = 'u32[144,128]{1,0:T(1,128)}', space=vmem, size = 0x12000, scoped, tag = 'internal scratch']
  %s0 = inlined_call_operand.vmem [shape: f32[2,8,128], index: 0, kind: input, shape index: {}]
  %s1 = inlined_call_operand.vmem [shape: f32[2,8,128], index: 1, kind: input, shape index: {}]
  %s2 = inlined_call_operand.vmem [shape: f32[2,8,128], index: 2, kind: input, shape index: {}]
  %s3 = inlined_call_operand.vmem [shape: f32[2,8,128], index: 3, kind: input, shape index: {}]
  %s4 = inlined_call_operand.vmem [shape: f32[2,8,128], index: 4, kind: input, shape index: {}]
  %s5 = inlined_call_operand.vmem [shape: f32[2,8,128], index: 5, kind: input, shape index: {}]
  %s6 = inlined_call_operand.vmem [shape: f32[1,16,2,128], index: 6, kind: output, shape index: {}]
  %s7 = sld [smem:[#allocation0]]
  $region38: #{gt_bce_dice_loss.1} parent=0
    _
  %s9 = ssub.s32 1, %s7
  %s10 = scalar_select 0, %s9, %s7
  // Predicated region
  $region2: #{gt_bce_dice_loss.1} parent=0 // pred_check
    _
  $region3: #{gt_bce_dice_loss.1} parent=0 // pred_check_branch
    %12 = sbr.rel (0) target = $region5
  $region4: #{gt_bce_dice_loss.1} parent=0 // pred_region
    %s13 = sadd.s32 0, 0
    %p14 = scmp.lt.s32.totalorder %s13, 0
    %s15 = scalar_select %p14, %s13, 0
    %s16 = smul.addr %s15, 8
    %s17 = scalar_lea.vmem %s0, %s16
    %s18 = sadd.s32 0, 0
  $region5: #{gt_bce_dice_loss.1} parent=0 // pred_fallthru
    _
  // Predicated region
  $region6: #{gt_bce_dice_loss.1} parent=0 // pred_check
    _
  $region7: #{gt_bce_dice_loss.1} parent=0 // pred_check_branch
    %20 = sbr.rel (0) target = $region9
  $region8: #{gt_bce_dice_loss.1} parent=0 // pred_region
    %s21 = sadd.s32 0, 0
    %p22 = scmp.lt.s32.totalorder %s21, 0
    %s23 = scalar_select %p22, %s21, 0
    %s24 = smul.addr %s23, 8
    %s25 = scalar_lea.vmem %s1, %s24
    %s26 = sadd.s32 0, 0
  $region9: #{gt_bce_dice_loss.1} parent=0 // pred_fallthru
    _
  // Predicated region
  $region10: #{gt_bce_dice_loss.1} parent=0 // pred_check
    _
  $region11: #{gt_bce_dice_loss.1} parent=0 // pred_check_branch
    %28 = sbr.rel (0) target = $region13
  $region12: #{gt_bce_dice_loss.1} parent=0 // pred_region
    %s29 = sadd.s32 0, 0
    %p30 = scmp.lt.s32.totalorder %s29, 0
    %s31 = scalar_select %p30, %s29, 0
    %s32 = smul.addr %s31, 8
    %s33 = scalar_lea.vmem %s2, %s32
    %s34 = sadd.s32 0, 0
  $region13: #{gt_bce_dice_loss.1} parent=0 // pred_fallthru
    _
  // Predicated region
  $region14: #{gt_bce_dice_loss.1} parent=0 // pred_check
    _
  $region15: #{gt_bce_dice_loss.1} parent=0 // pred_check_branch
    %36 = sbr.rel (0) target = $region17
  $region16: #{gt_bce_dice_loss.1} parent=0 // pred_region
    %s37 = sadd.s32 0, 0
    %p38 = scmp.lt.s32.totalorder %s37, 0
    %s39 = scalar_select %p38, %s37, 0
    %s40 = smul.addr %s39, 8
    %s41 = scalar_lea.vmem %s3, %s40
    %s42 = sadd.s32 0, 0
  $region17: #{gt_bce_dice_loss.1} parent=0 // pred_fallthru
    _
  // Predicated region
  $region18: #{gt_bce_dice_loss.1} parent=0 // pred_check
    _
  $region19: #{gt_bce_dice_loss.1} parent=0 // pred_check_branch
    %44 = sbr.rel (0) target = $region21
  $region20: #{gt_bce_dice_loss.1} parent=0 // pred_region
    %s45 = sadd.s32 0, 0
    %p46 = scmp.lt.s32.totalorder %s45, 0
    %s47 = scalar_select %p46, %s45, 0
    %s48 = smul.addr %s47, 8
    %s49 = scalar_lea.vmem %s4, %s48
    %s50 = sadd.s32 0, 0
  $region21: #{gt_bce_dice_loss.1} parent=0 // pred_fallthru
    _
  // Predicated region
  $region22: #{gt_bce_dice_loss.1} parent=0 // pred_check
    _
  $region23: #{gt_bce_dice_loss.1} parent=0 // pred_check_branch
    %52 = sbr.rel (0) target = $region25
  $region24: #{gt_bce_dice_loss.1} parent=0 // pred_region
    %s53 = sadd.s32 0, 0
    %p54 = scmp.lt.s32.totalorder %s53, 0
    %s55 = scalar_select %p54, %s53, 0
    %s56 = smul.addr %s55, 8
    %s57 = scalar_lea.vmem %s5, %s56
    %s58 = sadd.s32 0, 0
  $region25: #{gt_bce_dice_loss.1} parent=0 // pred_fallthru
    _
  %s59 = sadd.s32 0, 0
  %p60 = scmp.lt.s32.totalorder %s59, 0
  %s61 = scalar_select %p60, %s59, 0
  %s62 = smul.addr %s61, 8
  %s63 = scalar_lea.vmem %s0, %s62
  %s64 = sadd.s32 0, 0
  %p65 = scmp.lt.s32.totalorder %s64, 0
  %s66 = scalar_select %p65, %s64, 0
  %s67 = smul.addr %s66, 8
  %s68 = scalar_lea.vmem %s1, %s67
  %s69 = sadd.s32 0, 0
  %p70 = scmp.lt.s32.totalorder %s69, 0
  %s71 = scalar_select %p70, %s69, 0
  %s72 = smul.addr %s71, 8
  %s73 = scalar_lea.vmem %s2, %s72
  %s74 = sadd.s32 0, 0
  %p75 = scmp.lt.s32.totalorder %s74, 0
  %s76 = scalar_select %p75, %s74, 0
  %s77 = smul.addr %s76, 8
  %s78 = scalar_lea.vmem %s3, %s77
  %s79 = sadd.s32 0, 0
  %p80 = scmp.lt.s32.totalorder %s79, 0
  %s81 = scalar_select %p80, %s79, 0
  %s82 = smul.addr %s81, 8
  %s83 = scalar_lea.vmem %s4, %s82
  %s84 = sadd.s32 0, 0
  %p85 = scmp.lt.s32.totalorder %s84, 0
  %s86 = scalar_select %p85, %s84, 0
  %s87 = smul.addr %s86, 8
  %s88 = scalar_lea.vmem %s5, %s87
  %s89 = sadd.s32 0, 0
  %p90 = scmp.lt.s32.totalorder %s89, 0
  %s91 = scalar_select %p90, %s89, 0
  %s92 = smul.addr %s91, 8
  %s93 = scalar_lea.vmem %s0, %s92
  %s94 = sadd.s32 0, 0
  %s95 = sadd.s32 0, 0
  %p96 = scmp.lt.s32.totalorder %s95, 0
  %s97 = scalar_select %p96, %s95, 0
  %s98 = smul.addr %s97, 8
  %s99 = scalar_lea.vmem %s1, %s98
  %s100 = sadd.s32 0, 0
  %s101 = sadd.s32 0, 0
  %p102 = scmp.lt.s32.totalorder %s101, 0
  %s103 = scalar_select %p102, %s101, 0
  %s104 = smul.addr %s103, 8
  %s105 = scalar_lea.vmem %s2, %s104
  %s106 = sadd.s32 0, 0
  %s107 = sadd.s32 0, 0
  %p108 = scmp.lt.s32.totalorder %s107, 0
  %s109 = scalar_select %p108, %s107, 0
  %s110 = smul.addr %s109, 8
  %s111 = scalar_lea.vmem %s3, %s110
  %s112 = sadd.s32 0, 0
  %s113 = sadd.s32 0, 0
  %p114 = scmp.lt.s32.totalorder %s113, 0
  %s115 = scalar_select %p114, %s113, 0
  %s116 = smul.addr %s115, 8
  %s117 = scalar_lea.vmem %s4, %s116
  %s118 = sadd.s32 0, 0
  %s119 = sadd.s32 0, 0
  %p120 = scmp.lt.s32.totalorder %s119, 0
  %s121 = scalar_select %p120, %s119, 0
  %s122 = smul.addr %s121, 8
  %s123 = scalar_lea.vmem %s5, %s122
  %s124 = sadd.s32 0, 0
  %p125 = scmp.eq.s32.totalorder 0, 0
  // Predicated region
  $region26: #{gt_bce_dice_loss.1} parent=0 // pred_check
    %p126 = pneg %p125
  $region27: #{gt_bce_dice_loss.1} parent=0 // pred_check_branch
    %128 = sbr.rel (%p126) target = $region29
  $region28: #{gt_bce_dice_loss.1} parent=0 // pred_region
    %129 = vst [vmem:[%s6] sm:$0x3] 0.0
    %130 = vst [vmem:[%s6 + $0x2] sm:$0x3] 0.0
    %131 = vst [vmem:[%s6 + $0x4] sm:$0x3] 0.0
    %132 = vst [vmem:[%s6 + $0x6] sm:$0x3] 0.0
    %133 = vst [vmem:[%s6 + $0x8] sm:$0x3] 0.0
    %134 = vst [vmem:[%s6 + $0xa] sm:$0x3] 0.0
    %135 = vst [vmem:[%s6 + $0xc] sm:$0x3] 0.0
    %136 = vst [vmem:[%s6 + $0xe] sm:$0x3] 0.0
    %137 = vst [vmem:[%s6 + $0x10] sm:$0x3] 0.0
    %138 = vst [vmem:[%s6 + $0x12] sm:$0x3] 0.0
    %139 = vst [vmem:[%s6 + $0x14] sm:$0x3] 0.0
    %140 = vst [vmem:[%s6 + $0x16] sm:$0x3] 0.0
    %141 = vst [vmem:[%s6 + $0x18] sm:$0x3] 0.0
    %142 = vst [vmem:[%s6 + $0x1a] sm:$0x3] 0.0
    %143 = vst [vmem:[%s6 + $0x1c] sm:$0x3] 0.0
    %144 = vst [vmem:[%s6 + $0x1e] sm:$0x3] 0.0
  $region29: #{gt_bce_dice_loss.1} parent=0 // pred_fallthru
    _
  %v145 = vld [vmem:[%s123] sm:$0xff]
  %v146 = vld [vmem:[%s123 + $0x8] sm:$0xff]
  %v147 = vsub.f32 1.0, %v145
  %v148 = vsub.f32 1.0, %v146
  %v149 = vld [vmem:[%s93] sm:$0xff]
  %v150 = vld [vmem:[%s93 + $0x8] sm:$0xff]
  %v151 = vlog2.pop %v149
  %v152 = vmul.f32 %v151, 0.6931472
  %v153 = vlog2.pop %v150
  %v154 = vmul.f32 %v153, 0.6931472
  %v155 = vmax.f32 %v152, -100.0
  %v156 = vmax.f32 %v154, -100.0
  %v157 = vsub.f32 1.0, %v149
  %v158 = vsub.f32 1.0, %v150
  %v159 = vlog2.pop %v157
  %v160 = vmul.f32 %v159, 0.6931472
  %v161 = vlog2.pop %v158
  %v162 = vmul.f32 %v161, 0.6931472
  %v163 = vmax.f32 %v160, -100.0
  %v164 = vmax.f32 %v162, -100.0
  %v165 = vmul.f32 %v145, %v155
  %v166 = vmul.f32 %v146, %v156
  %v167 = vmul.f32 %v147, %v163
  %v168 = vmul.f32 %v148, %v164
  %v169 = vadd.f32 %v165, %v167
  %v170 = vadd.f32 %v166, %v168
  %v171 = vld [vmem:[%s6] sm:$0x3]
  %v172 = vrot.slane %v169, 4
  %v173 = vadd.f32 %v169, %v172
  %v174 = vrot.slane %v173, 2
  %v175 = vadd.f32 %v173, %v174
  %v176 = vrot.slane %v175, 1
  %v177 = vadd.f32 %v175, %v176
  %v178 = vrot.slane %v170, 4
  %v179 = vadd.f32 %v170, %v178
  %v180 = vrot.slane %v179, 2
  %v181 = vadd.f32 %v179, %v180
  %v182 = vrot.slane %v181, 1
  %v183 = vadd.f32 %v181, %v182
  %vm186 = vcmask 1041409
  %v187 = vsel %vm186, %v183, %v177
  %v189 = vadd.f32 %v171, %v187
  %190 = vst [vmem:[%s6] sm:$0x3] %v189
  %s191 = scalar_lea.vmem %s6, 2
  %v192 = vld [vmem:[%s191] sm:$0x3]
  %v193 = vmul.f32 %v149, %v145
  %v194 = vmul.f32 %v150, %v146
  %v195 = vrot.slane %v193, 4
  %v196 = vadd.f32 %v193, %v195
  %v197 = vrot.slane %v196, 2
  %v198 = vadd.f32 %v196, %v197
  %v199 = vrot.slane %v198, 1
  %v200 = vadd.f32 %v198, %v199
  %v201 = vrot.slane %v194, 4
  %v202 = vadd.f32 %v194, %v201
  %v203 = vrot.slane %v202, 2
  %v204 = vadd.f32 %v202, %v203
  %v205 = vrot.slane %v204, 1
  %v206 = vadd.f32 %v204, %v205
  %v209 = vsel %vm186, %v206, %v200
  %v211 = vadd.f32 %v192, %v209
  %212 = vst [vmem:[%s191] sm:$0x3] %v211
  %s213 = scalar_lea.vmem %s6, 4
  %v214 = vld [vmem:[%s213] sm:$0x3]
  %v215 = vrot.slane %v149, 4
  %v216 = vadd.f32 %v149, %v215
  %v217 = vrot.slane %v216, 2
  %v218 = vadd.f32 %v216, %v217
  %v219 = vrot.slane %v218, 1
  %v220 = vadd.f32 %v218, %v219
  %v221 = vrot.slane %v150, 4
  %v222 = vadd.f32 %v150, %v221
  %v223 = vrot.slane %v222, 2
  %v224 = vadd.f32 %v222, %v223
  %v225 = vrot.slane %v224, 1
  %v226 = vadd.f32 %v224, %v225
  %v229 = vsel %vm186, %v226, %v220
  %v231 = vadd.f32 %v214, %v229
  %232 = vst [vmem:[%s213] sm:$0x3] %v231
  %v233 = vld [vmem:[%s99] sm:$0xff]
  %v234 = vld [vmem:[%s99 + $0x8] sm:$0xff]
  %v235 = vlog2.pop %v233
  %v236 = vmul.f32 %v235, 0.6931472
  %v237 = vlog2.pop %v234
  %v238 = vmul.f32 %v237, 0.6931472
  %v239 = vmax.f32 %v236, -100.0
  %v240 = vmax.f32 %v238, -100.0
  %v241 = vsub.f32 1.0, %v233
  %v242 = vsub.f32 1.0, %v234
  %v243 = vlog2.pop %v241
  %v244 = vmul.f32 %v243, 0.6931472
  %v245 = vlog2.pop %v242
  %v246 = vmul.f32 %v245, 0.6931472
  %v247 = vmax.f32 %v244, -100.0
  %v248 = vmax.f32 %v246, -100.0
  %v249 = vmul.f32 %v145, %v239
  %v250 = vmul.f32 %v146, %v240
  %v251 = vmul.f32 %v147, %v247
  %v252 = vmul.f32 %v148, %v248
  %v253 = vadd.f32 %v249, %v251
  %v254 = vadd.f32 %v250, %v252
  %s255 = scalar_lea.vmem %s6, 6
  %v256 = vld [vmem:[%s255] sm:$0x3]
  %v257 = vrot.slane %v253, 4
  %v258 = vadd.f32 %v253, %v257
  %v259 = vrot.slane %v258, 2
  %v260 = vadd.f32 %v258, %v259
  %v261 = vrot.slane %v260, 1
  %v262 = vadd.f32 %v260, %v261
  %v263 = vrot.slane %v254, 4
  %v264 = vadd.f32 %v254, %v263
  %v265 = vrot.slane %v264, 2
  %v266 = vadd.f32 %v264, %v265
  %v267 = vrot.slane %v266, 1
  %v268 = vadd.f32 %v266, %v267
  %v271 = vsel %vm186, %v268, %v262
  %v273 = vadd.f32 %v256, %v271
  %274 = vst [vmem:[%s255] sm:$0x3] %v273
  %s275 = scalar_lea.vmem %s6, 8
  %v276 = vld [vmem:[%s275] sm:$0x3]
  %v277 = vmul.f32 %v233, %v145
  %v278 = vmul.f32 %v234, %v146
  %v279 = vrot.slane %v277, 4
  %v280 = vadd.f32 %v277, %v279
  %v281 = vrot.slane %v280, 2
  %v282 = vadd.f32 %v280, %v281
  %v283 = vrot.slane %v282, 1
  %v284 = vadd.f32 %v282, %v283
  %v285 = vrot.slane %v278, 4
  %v286 = vadd.f32 %v278, %v285
  %v287 = vrot.slane %v286, 2
  %v288 = vadd.f32 %v286, %v287
  %v289 = vrot.slane %v288, 1
  %v290 = vadd.f32 %v288, %v289
  %v293 = vsel %vm186, %v290, %v284
  %v295 = vadd.f32 %v276, %v293
  %296 = vst [vmem:[%s275] sm:$0x3] %v295
  %s297 = scalar_lea.vmem %s6, 10
  %v298 = vld [vmem:[%s297] sm:$0x3]
  %v299 = vrot.slane %v233, 4
  %v300 = vadd.f32 %v233, %v299
  %v301 = vrot.slane %v300, 2
  %v302 = vadd.f32 %v300, %v301
  %v303 = vrot.slane %v302, 1
  %v304 = vadd.f32 %v302, %v303
  %v305 = vrot.slane %v234, 4
  %v306 = vadd.f32 %v234, %v305
  %v307 = vrot.slane %v306, 2
  %v308 = vadd.f32 %v306, %v307
  %v309 = vrot.slane %v308, 1
  %v310 = vadd.f32 %v308, %v309
  %v313 = vsel %vm186, %v310, %v304
  %v315 = vadd.f32 %v298, %v313
  %316 = vst [vmem:[%s297] sm:$0x3] %v315
  %v317 = vld [vmem:[%s105] sm:$0xff]
  %v318 = vld [vmem:[%s105 + $0x8] sm:$0xff]
  %v319 = vlog2.pop %v317
  %v320 = vmul.f32 %v319, 0.6931472
  %v321 = vlog2.pop %v318
  %v322 = vmul.f32 %v321, 0.6931472
  %v323 = vmax.f32 %v320, -100.0
  %v324 = vmax.f32 %v322, -100.0
  %v325 = vsub.f32 1.0, %v317
  %v326 = vsub.f32 1.0, %v318
  %v327 = vlog2.pop %v325
  %v328 = vmul.f32 %v327, 0.6931472
  %v329 = vlog2.pop %v326
  %v330 = vmul.f32 %v329, 0.6931472
  %v331 = vmax.f32 %v328, -100.0
  %v332 = vmax.f32 %v330, -100.0
  %v333 = vmul.f32 %v145, %v323
  %v334 = vmul.f32 %v146, %v324
  %v335 = vmul.f32 %v147, %v331
  %v336 = vmul.f32 %v148, %v332
  %v337 = vadd.f32 %v333, %v335
  %v338 = vadd.f32 %v334, %v336
  %s339 = scalar_lea.vmem %s6, 12
  %v340 = vld [vmem:[%s339] sm:$0x3]
  %v341 = vrot.slane %v337, 4
  %v342 = vadd.f32 %v337, %v341
  %v343 = vrot.slane %v342, 2
  %v344 = vadd.f32 %v342, %v343
  %v345 = vrot.slane %v344, 1
  %v346 = vadd.f32 %v344, %v345
  %v347 = vrot.slane %v338, 4
  %v348 = vadd.f32 %v338, %v347
  %v349 = vrot.slane %v348, 2
  %v350 = vadd.f32 %v348, %v349
  %v351 = vrot.slane %v350, 1
  %v352 = vadd.f32 %v350, %v351
  %v355 = vsel %vm186, %v352, %v346
  %v357 = vadd.f32 %v340, %v355
  %358 = vst [vmem:[%s339] sm:$0x3] %v357
  %s359 = scalar_lea.vmem %s6, 14
  %v360 = vld [vmem:[%s359] sm:$0x3]
  %v361 = vmul.f32 %v317, %v145
  %v362 = vmul.f32 %v318, %v146
  %v363 = vrot.slane %v361, 4
  %v364 = vadd.f32 %v361, %v363
  %v365 = vrot.slane %v364, 2
  %v366 = vadd.f32 %v364, %v365
  %v367 = vrot.slane %v366, 1
  %v368 = vadd.f32 %v366, %v367
  %v369 = vrot.slane %v362, 4
  %v370 = vadd.f32 %v362, %v369
  %v371 = vrot.slane %v370, 2
  %v372 = vadd.f32 %v370, %v371
  %v373 = vrot.slane %v372, 1
  %v374 = vadd.f32 %v372, %v373
  %v377 = vsel %vm186, %v374, %v368
  %v379 = vadd.f32 %v360, %v377
  %380 = vst [vmem:[%s359] sm:$0x3] %v379
  %s381 = scalar_lea.vmem %s6, 16
  %v382 = vld [vmem:[%s381] sm:$0x3]
  %v383 = vrot.slane %v317, 4
  %v384 = vadd.f32 %v317, %v383
  %v385 = vrot.slane %v384, 2
  %v386 = vadd.f32 %v384, %v385
  %v387 = vrot.slane %v386, 1
  %v388 = vadd.f32 %v386, %v387
  %v389 = vrot.slane %v318, 4
  %v390 = vadd.f32 %v318, %v389
  %v391 = vrot.slane %v390, 2
  %v392 = vadd.f32 %v390, %v391
  %v393 = vrot.slane %v392, 1
  %v394 = vadd.f32 %v392, %v393
  %v397 = vsel %vm186, %v394, %v388
  %v399 = vadd.f32 %v382, %v397
  %400 = vst [vmem:[%s381] sm:$0x3] %v399
  %v401 = vld [vmem:[%s111] sm:$0xff]
  %v402 = vld [vmem:[%s111 + $0x8] sm:$0xff]
  %v403 = vlog2.pop %v401
  %v404 = vmul.f32 %v403, 0.6931472
  %v405 = vlog2.pop %v402
  %v406 = vmul.f32 %v405, 0.6931472
  %v407 = vmax.f32 %v404, -100.0
  %v408 = vmax.f32 %v406, -100.0
  %v409 = vsub.f32 1.0, %v401
  %v410 = vsub.f32 1.0, %v402
  %v411 = vlog2.pop %v409
  %v412 = vmul.f32 %v411, 0.6931472
  %v413 = vlog2.pop %v410
  %v414 = vmul.f32 %v413, 0.6931472
  %v415 = vmax.f32 %v412, -100.0
  %v416 = vmax.f32 %v414, -100.0
  %v417 = vmul.f32 %v145, %v407
  %v418 = vmul.f32 %v146, %v408
  %v419 = vmul.f32 %v147, %v415
  %v420 = vmul.f32 %v148, %v416
  %v421 = vadd.f32 %v417, %v419
  %v422 = vadd.f32 %v418, %v420
  %s423 = scalar_lea.vmem %s6, 18
  %v424 = vld [vmem:[%s423] sm:$0x3]
  %v425 = vrot.slane %v421, 4
  %v426 = vadd.f32 %v421, %v425
  %v427 = vrot.slane %v426, 2
  %v428 = vadd.f32 %v426, %v427
  %v429 = vrot.slane %v428, 1
  %v430 = vadd.f32 %v428, %v429
  %v431 = vrot.slane %v422, 4
  %v432 = vadd.f32 %v422, %v431
  %v433 = vrot.slane %v432, 2
  %v434 = vadd.f32 %v432, %v433
  %v435 = vrot.slane %v434, 1
  %v436 = vadd.f32 %v434, %v435
  %v439 = vsel %vm186, %v436, %v430
  %v441 = vadd.f32 %v424, %v439
  %442 = vst [vmem:[%s423] sm:$0x3] %v441
  %s443 = scalar_lea.vmem %s6, 20
  %v444 = vld [vmem:[%s443] sm:$0x3]
  %v445 = vmul.f32 %v401, %v145
  %v446 = vmul.f32 %v402, %v146
  %v447 = vrot.slane %v445, 4
  %v448 = vadd.f32 %v445, %v447
  %v449 = vrot.slane %v448, 2
  %v450 = vadd.f32 %v448, %v449
  %v451 = vrot.slane %v450, 1
  %v452 = vadd.f32 %v450, %v451
  %v453 = vrot.slane %v446, 4
  %v454 = vadd.f32 %v446, %v453
  %v455 = vrot.slane %v454, 2
  %v456 = vadd.f32 %v454, %v455
  %v457 = vrot.slane %v456, 1
  %v458 = vadd.f32 %v456, %v457
  %v461 = vsel %vm186, %v458, %v452
  %v463 = vadd.f32 %v444, %v461
  %464 = vst [vmem:[%s443] sm:$0x3] %v463
  %s465 = scalar_lea.vmem %s6, 22
  %v466 = vld [vmem:[%s465] sm:$0x3]
  %v467 = vrot.slane %v401, 4
  %v468 = vadd.f32 %v401, %v467
  %v469 = vrot.slane %v468, 2
  %v470 = vadd.f32 %v468, %v469
  %v471 = vrot.slane %v470, 1
  %v472 = vadd.f32 %v470, %v471
  %v473 = vrot.slane %v402, 4
  %v474 = vadd.f32 %v402, %v473
  %v475 = vrot.slane %v474, 2
  %v476 = vadd.f32 %v474, %v475
  %v477 = vrot.slane %v476, 1
  %v478 = vadd.f32 %v476, %v477
  %v481 = vsel %vm186, %v478, %v472
  %v483 = vadd.f32 %v466, %v481
  %484 = vst [vmem:[%s465] sm:$0x3] %v483
  %v485 = vld [vmem:[%s117] sm:$0xff]
  %v486 = vld [vmem:[%s117 + $0x8] sm:$0xff]
  %v487 = vlog2.pop %v485
  %v488 = vmul.f32 %v487, 0.6931472
  %v489 = vlog2.pop %v486
  %v490 = vmul.f32 %v489, 0.6931472
  %v491 = vmax.f32 %v488, -100.0
  %v492 = vmax.f32 %v490, -100.0
  %v493 = vsub.f32 1.0, %v485
  %v494 = vsub.f32 1.0, %v486
  %v495 = vlog2.pop %v493
  %v496 = vmul.f32 %v495, 0.6931472
  %v497 = vlog2.pop %v494
  %v498 = vmul.f32 %v497, 0.6931472
  %v499 = vmax.f32 %v496, -100.0
  %v500 = vmax.f32 %v498, -100.0
  %v501 = vmul.f32 %v145, %v491
  %v502 = vmul.f32 %v146, %v492
  %v503 = vmul.f32 %v147, %v499
  %v504 = vmul.f32 %v148, %v500
  %v505 = vadd.f32 %v501, %v503
  %v506 = vadd.f32 %v502, %v504
  %s507 = scalar_lea.vmem %s6, 24
  %v508 = vld [vmem:[%s507] sm:$0x3]
  %v509 = vrot.slane %v505, 4
  %v510 = vadd.f32 %v505, %v509
  %v511 = vrot.slane %v510, 2
  %v512 = vadd.f32 %v510, %v511
  %v513 = vrot.slane %v512, 1
  %v514 = vadd.f32 %v512, %v513
  %v515 = vrot.slane %v506, 4
  %v516 = vadd.f32 %v506, %v515
  %v517 = vrot.slane %v516, 2
  %v518 = vadd.f32 %v516, %v517
  %v519 = vrot.slane %v518, 1
  %v520 = vadd.f32 %v518, %v519
  %v523 = vsel %vm186, %v520, %v514
  %v525 = vadd.f32 %v508, %v523
  %526 = vst [vmem:[%s507] sm:$0x3] %v525
  %s527 = scalar_lea.vmem %s6, 26
  %v528 = vld [vmem:[%s527] sm:$0x3]
  %v529 = vmul.f32 %v485, %v145
  %v530 = vmul.f32 %v486, %v146
  %v531 = vrot.slane %v529, 4
  %v532 = vadd.f32 %v529, %v531
  %v533 = vrot.slane %v532, 2
  %v534 = vadd.f32 %v532, %v533
  %v535 = vrot.slane %v534, 1
  %v536 = vadd.f32 %v534, %v535
  %v537 = vrot.slane %v530, 4
  %v538 = vadd.f32 %v530, %v537
  %v539 = vrot.slane %v538, 2
  %v540 = vadd.f32 %v538, %v539
  %v541 = vrot.slane %v540, 1
  %v542 = vadd.f32 %v540, %v541
  %v545 = vsel %vm186, %v542, %v536
  %v547 = vadd.f32 %v528, %v545
  %548 = vst [vmem:[%s527] sm:$0x3] %v547
  %s549 = scalar_lea.vmem %s6, 28
  %v550 = vld [vmem:[%s549] sm:$0x3]
  %v551 = vrot.slane %v485, 4
  %v552 = vadd.f32 %v485, %v551
  %v553 = vrot.slane %v552, 2
  %v554 = vadd.f32 %v552, %v553
  %v555 = vrot.slane %v554, 1
  %v556 = vadd.f32 %v554, %v555
  %v557 = vrot.slane %v486, 4
  %v558 = vadd.f32 %v486, %v557
  %v559 = vrot.slane %v558, 2
  %v560 = vadd.f32 %v558, %v559
  %v561 = vrot.slane %v560, 1
  %v562 = vadd.f32 %v560, %v561
  %v565 = vsel %vm186, %v562, %v556
  %v567 = vadd.f32 %v550, %v565
  %568 = vst [vmem:[%s549] sm:$0x3] %v567
  %s569 = scalar_lea.vmem %s6, 30
  %v570 = vld [vmem:[%s569] sm:$0x3]
  %v571 = vrot.slane %v145, 4
  %v572 = vadd.f32 %v145, %v571
  %v573 = vrot.slane %v572, 2
  %v574 = vadd.f32 %v572, %v573
  %v575 = vrot.slane %v574, 1
  %v576 = vadd.f32 %v574, %v575
  %v577 = vrot.slane %v146, 4
  %v578 = vadd.f32 %v146, %v577
  %v579 = vrot.slane %v578, 2
  %v580 = vadd.f32 %v578, %v579
  %v581 = vrot.slane %v580, 1
  %v582 = vadd.f32 %v580, %v581
  %v585 = vsel %vm186, %v582, %v576
  %v587 = vadd.f32 %v570, %v585
  %588 = vst [vmem:[%s569] sm:$0x3] %v587
  // Predicated region
  $region30: #{gt_bce_dice_loss.1} parent=0 // pred_check
    _
  $region31: #{gt_bce_dice_loss.1} parent=0 // pred_check_branch
    %590 = sbr.rel (0) target = $region33
  $region32: #{gt_bce_dice_loss.1} parent=0 // pred_region
    _
  $region33: #{gt_bce_dice_loss.1} parent=0 // pred_fallthru
    _
  // Predicated region
  $region34: #{gt_bce_dice_loss.1} parent=0 // pred_check
    _
  $region35: #{gt_bce_dice_loss.1} parent=0 // pred_check_branch
    %592 = sbr.rel (0) target = $region37
  $region36: #{gt_bce_dice_loss.1} parent=0 // pred_region
    _
  $region37: #{gt_bce_dice_loss.1} parent=0 // pred_fallthru
    _

</llo_original>
